<compile_context>
chip_gen: v6e
topology: v6e:2x2x1
jax: 0.10.0
libtpu: 0.0.40
codegen_flags: <defaults>
</compile_context>

<pallas_src>
import functools

import jax
import jax.numpy as jnp
from jax import lax
from jax.experimental import pallas as pl
from jax.experimental.pallas import tpu as pltpu


# ---------------------------------------------------------------------------
# Pallas kernel: fused "tap matmul" convolution (+ bias/BN + ReLU epilogue)
# ---------------------------------------------------------------------------
def _make_tap_conv_kernel(tap_plan, M, apply_relu, multi_plane):
    """One grid step of a KxK conv as a single MXU matmul.

    The padded spatial plane is flattened into the lane axis; each filter tap
    is a cheap lane-offset slice of the already-loaded input slab.  The taps
    are concatenated along sublanes into the im2col operand (KH*KW*C_in, M)
    and contracted against the tap-fused weight matrix (C_out, KH*KW*C_in) in
    ONE dot (big K -> good MXU contraction, one weight push).  Bias (+ folded
    BatchNorm) and ReLU run in the f32 epilogue, then a single lane-dense
    store writes the NCHW output tile.
    """

    def kernel(x_ref, w_ref, b_ref, o_ref):
        # x_ref: (C_in, FLAT) bf16             (stride-1 path)          or
        #        (4, C_in, FLAT) bf16          (stride-2 polyphase path)
        # w_ref: (C_out, KH*KW*C_in) bf16      column order (kh, kw, ci)
        # b_ref: (C_out, 1) f32                conv bias with BN folded in
        # o_ref: (C_out, M)                    NCHW output, spatial in lanes
        xv = x_ref[...]
        if multi_plane:
            taps = [xv[p, :, off:off + M] for p, off in tap_plan]
        else:
            taps = [xv[:, off:off + M] for _, off in tap_plan]
        patches = jnp.concatenate(taps, axis=0)            # (KH*KW*C_in, M)
        acc = jax.lax.dot_general(                          # one big-K matmul
            w_ref[...], patches,
            dimension_numbers=(((1,), (0,)), ((), ())),
            preferred_element_type=jnp.float32)             # (C_out, M) f32
        acc = acc + b_ref[...]
        if apply_relu:
            acc = jnp.maximum(acc, 0.0)
        o_ref[...] = acc.astype(o_ref.dtype)

    return kernel


def _round_up(x, m):
    return (x + m - 1) // m * m


def _pick_tile_h(h_out, wp, c_in, kh, slab_budget=2 << 20):
    """Largest H-tile dividing H_out whose flat output width is lane aligned
    (TH*Wp % 128 == 0, or the full plane) and whose bf16 input slab stays
    under a conservative per-step budget (safe for v7x's 64 MiB VMEM with
    double buffering)."""
    best = None
    for th in range(1, h_out + 1):
        if h_out % th:
            continue
        if th != h_out and (th * wp) % 128 != 0:
            continue
        if (th + kh) * wp * c_in * 2 <= slab_budget:
            best = th
    return best if best is not None else h_out


# ---------------------------------------------------------------------------
# stride-1 conv wrapper (H-tiled grid, lane-dense NCHW in/out)
# ---------------------------------------------------------------------------
@functools.partial(
    jax.jit,
    static_argnames=("kernel_size", "padding", "tile_h", "relu", "out_dtype"))
def _conv2d_s1_pallas(x, w_mat, b_col, *, kernel_size, padding, tile_h, relu,
                      out_dtype):
    """stride-1 Conv2d (torch.nn.Conv2d semantics), NCHW in / NCHW out."""
    N, C_in, H, W = x.shape
    C_out = w_mat.shape[0]
    KH = KW = kernel_size
    C_pad = w_mat.shape[1] // (KH * KW)     # in-channels zero-padded to 16
    H_out = H + 2 * padding - KH + 1
    W_out = W + 2 * padding - KW + 1
    Wp = W + 2 * padding
    TH = tile_h
    assert H_out % TH == 0
    nH = H_out // TH
    TIN_FLAT = (TH + KH) * Wp   # KH-1 halo rows + 1 spare row for the W halo
    M = TH * Wp
    K_TOT = KH * KW * C_pad

    xb = x.astype(jnp.bfloat16)
    if C_pad != C_in:
        xb = jnp.pad(xb, ((0, 0), (0, C_pad - C_in), (0, 0), (0, 0)))
    # zero-pad: width (p, p); height (p, p + 1).  The extra bottom row only
    # feeds the discarded W-halo output columns but keeps every tap slice
    # strictly in-bounds of its tile.
    xp = jnp.pad(xb, ((0, 0), (0, 0), (padding, padding + 1),
                      (padding, padding)))
    # halo'd H tiles with spatial flattened into the minor (lane) axis.
    tiles = jnp.stack(
        [xp[:, :, t * TH:t * TH + TH + KH, :] for t in range(nH)], axis=1)
    tiles = tiles.reshape(N, nH, C_pad, TIN_FLAT)

    tap_plan = tuple((0, kh * Wp + kw) for kh in range(KH) for kw in range(KW))
    kernel = _make_tap_conv_kernel(tap_plan, M, relu, multi_plane=False)

    out_flat = pl.pallas_call(
        kernel,
        out_shape=jax.ShapeDtypeStruct((N, C_out, H_out * Wp), out_dtype),
        grid_spec=pltpu.PrefetchScalarGridSpec(
            num_scalar_prefetch=0,
            grid=(N, nH),
            in_specs=[
                pl.BlockSpec((None, None, C_pad, TIN_FLAT),
                             lambda n, t: (n, t, 0, 0)),
                pl.BlockSpec((C_out, K_TOT), lambda n, t: (0, 0)),
                pl.BlockSpec((C_out, 1), lambda n, t: (0, 0)),
            ],
            out_specs=pl.BlockSpec((None, C_out, M), lambda n, t: (n, 0, t)),
        ),
        compiler_params=pltpu.CompilerParams(
            dimension_semantics=("parallel", "parallel"),
            vmem_limit_bytes=64 * 1024 * 1024),
    )(tiles, w_mat, b_col)

    # Drop the (KW-1) garbage columns per row; result is already NCHW.
    return out_flat.reshape(N, C_out, H_out, Wp)[:, :, :, :W_out]


# ---------------------------------------------------------------------------
# stride-2 conv wrapper (polyphase decomposition, no wasted FLOPs)
# ---------------------------------------------------------------------------
@functools.partial(
    jax.jit, static_argnames=("kernel_size", "padding", "relu", "out_dtype"))
def _conv2d_s2_pallas(x, w_mat, b_col, *, kernel_size, padding, relu,
                      out_dtype):
    """stride-2 3x3 Conv2d: the padded input is split into its 4 even/odd
    (row, col) phase planes so every filter tap is again a constant lane
    offset into one plane -> one fused MXU matmul, no compute-then-subsample.
    """
    N, C_in, H, W = x.shape
    C_out = w_mat.shape[0]
    KH = KW = kernel_size
    assert kernel_size == 3 and padding == 1, "BSVD DownBlock uses 3x3, pad 1"
    assert H % 2 == 0 and W % 2 == 0
    C_pad = w_mat.shape[1] // (KH * KW)
    H_out = (H + 2 * padding - KH) // 2 + 1
    W_out = (W + 2 * padding - KW) // 2 + 1
    K_TOT = KH * KW * C_pad

    xb = x.astype(jnp.bfloat16)
    if C_pad != C_in:
        xb = jnp.pad(xb, ((0, 0), (0, C_pad - C_in), (0, 0), (0, 0)))
    # height gets 2 extra bottom rows (one per phase) so the kh=2 taps of the
    # garbage output column stay in-bounds of the flattened phase planes.
    xp = jnp.pad(xb, ((0, 0), (0, 0), (padding, padding + 2),
                      (padding, padding)))
    Hp, Wp2 = H + 2 * padding + 2, W + 2 * padding
    Hq, Wq = Hp // 2, Wp2 // 2
    FLAT = Hq * Wq
    M = H_out * Wq
    # phase p = 2*(row parity) + (col parity)
    xph = xp.reshape(N, C_pad, Hq, 2, Wq, 2)
    xph = jnp.transpose(xph, (0, 3, 5, 1, 2, 4)).reshape(N, 4, C_pad, FLAT)

    tap_plan = tuple((2 * (kh % 2) + (kw % 2), (kh // 2) * Wq + (kw // 2))
                     for kh in range(KH) for kw in range(KW))
    kernel = _make_tap_conv_kernel(tap_plan, M, relu, multi_plane=True)

    # TODO(synk): H-tile the stride-2 path for very large frames (full plane
    # per grid step here; fine for the downsampled resolutions of this net).
    out_flat = pl.pallas_call(
        kernel,
        out_shape=jax.ShapeDtypeStruct((N, C_out, M), out_dtype),
        grid_spec=pltpu.PrefetchScalarGridSpec(
            num_scalar_prefetch=0,
            grid=(N,),
            in_specs=[
                pl.BlockSpec((None, 4, C_pad, FLAT), lambda n: (n, 0, 0, 0)),
                pl.BlockSpec((C_out, K_TOT), lambda n: (0, 0)),
                pl.BlockSpec((C_out, 1), lambda n: (0, 0)),
            ],
            out_specs=pl.BlockSpec((None, C_out, M), lambda n: (n, 0, 0)),
        ),
        compiler_params=pltpu.CompilerParams(
            dimension_semantics=("parallel",),
            vmem_limit_bytes=64 * 1024 * 1024),
    )(xph, w_mat, b_col)

    return out_flat.reshape(N, C_out, H_out, Wq)[:, :, :, :W_out]


# ---------------------------------------------------------------------------
# pure-XLA reference conv (for in-script correctness checks only)
# ---------------------------------------------------------------------------
@functools.partial(
    jax.jit, static_argnames=("stride", "padding", "relu", "out_dtype"))
def _conv2d_ref(x, w_oihw, bias, *, stride, padding, relu, out_dtype):
    xb = x.astype(jnp.bfloat16).astype(jnp.float32)
    wb = w_oihw.astype(jnp.bfloat16).astype(jnp.float32)
    out = lax.conv_general_dilated(
        xb, wb, (stride, stride),
        [(padding, padding), (padding, padding)],
        dimension_numbers=("NCHW", "OIHW", "NCHW"),
        precision=lax.Precision.HIGHEST)
    out = out + bias[None, :, None, None]
    if relu:
        out = jnp.maximum(out, 0.0)
    return out.astype(out_dtype)


# ---------------------------------------------------------------------------
# Module layer: Conv2d (+ folded eval-mode BN) (+ ReLU), Pallas-backed
# ---------------------------------------------------------------------------
class Conv2dBNAct:
    def __init__(self, in_ch, out_ch, key, *, kernel_size=3, padding=1,
                 stride=1, bias=True, bn=True, relu=True,
                 out_dtype=jnp.bfloat16, backend="pallas"):
        self.in_ch, self.out_ch = in_ch, out_ch
        self.kernel_size, self.padding, self.stride = kernel_size, padding, stride
        self.relu, self.out_dtype, self.backend = relu, out_dtype, backend

        kw_, kb_, kg_, kbt_, km_, kv_ = jax.random.split(key, 6)
        fan_in = in_ch * kernel_size * kernel_size
        # kaiming_normal_(nonlinearity='relu'), like DenBlock.reset_params
        weight = jax.random.normal(
            kw_, (out_ch, in_ch, kernel_size, kernel_size),
            jnp.float32) * (2.0 / fan_in) ** 0.5
        bound = 1.0 / fan_in ** 0.5
        bias_v = (jax.random.uniform(kb_, (out_ch,), jnp.float32, -bound, bound)
                  if bias else jnp.zeros((out_ch,), jnp.float32))
        if bn:
            # TODO(synk): eval-mode BatchNorm (running stats) folded into the
            # conv; training-mode batch statistics are not implemented.
            gamma = jax.random.uniform(kg_, (out_ch,), jnp.float32, 0.9, 1.1)
            beta = jax.random.uniform(kbt_, (out_ch,), jnp.float32, -0.1, 0.1)
            mean = jax.random.uniform(km_, (out_ch,), jnp.float32, -0.1, 0.1)
            var = jax.random.uniform(kv_, (out_ch,), jnp.float32, 0.9, 1.1)
            scale = gamma * jax.lax.rsqrt(var + 1e-5)
            weight = weight * scale[:, None, None, None]
            bias_v = (bias_v - mean) * scale + beta
        self.weight, self.bias = weight, bias_v

        # Fused-tap weight matrix prepared ONCE: (C_out, KH*KW*C_pad) bf16,
        # column order (kh, kw, ci); in-channels zero-padded to a multiple of
        # 16 so the kernel's sublane concat stays aligned for bf16 packing.
        c_pad = _round_up(in_ch, 16)
        w_pad = jnp.pad(weight, ((0, 0), (0, c_pad - in_ch), (0, 0), (0, 0)))
        self.w_mat = (jnp.transpose(w_pad, (0, 2, 3, 1))
                      .reshape(out_ch, kernel_size * kernel_size * c_pad)
                      .astype(jnp.bfloat16))
        self.b_col = bias_v.reshape(out_ch, 1).astype(jnp.float32)
        self.c_pad = c_pad

    def __call__(self, x):
        if x is None:
            return None
        if self.backend != "pallas":
            return _conv2d_ref(x, self.weight, self.bias, stride=self.stride,
                               padding=self.padding, relu=self.relu,
                               out_dtype=self.out_dtype)
        if self.stride == 1:
            _, _, H, W = x.shape
            h_out = H + 2 * self.padding - self.kernel_size + 1
            wp = W + 2 * self.padding
            tile_h = _pick_tile_h(h_out, wp, self.c_pad, self.kernel_size)
            return _conv2d_s1_pallas(
                x, self.w_mat, self.b_col, kernel_size=self.kernel_size,
                padding=self.padding, tile_h=tile_h, relu=self.relu,
                out_dtype=self.out_dtype)
        assert self.stride == 2
        return _conv2d_s2_pallas(
            x, self.w_mat, self.b_col, kernel_size=self.kernel_size,
            padding=self.padding, relu=self.relu, out_dtype=self.out_dtype)


# ---------------------------------------------------------------------------
# BSVD modules (host-side orchestration mirrors the PyTorch code exactly)
# ---------------------------------------------------------------------------
class BiBufferConvJax:
    """BiBufferConv / ShiftConv: stateful streaming temporal-shift conv.  The
    buffer shuffle and None-gating are host-side Python state exactly as in
    PyTorch; the conv (+ folded BN + ReLU of the surrounding MemCvBlock) is
    one fused Pallas call."""

    FOLD_DIV = 8

    def __init__(self, in_ch, out_ch, key, *, kernel_size=3, padding=1,
                 bn=True, relu=True, out_dtype=jnp.bfloat16, backend="pallas"):
        self.conv = Conv2dBNAct(in_ch, out_ch, key, kernel_size=kernel_size,
                                padding=padding, stride=1, bn=bn, relu=relu,
                                out_dtype=out_dtype, backend=backend)
        self.reset()

    def reset(self):
        self.left_fold_2fold = None
        self.center = None

    def __call__(self, input_right):
        if input_right is not None:
            self.n, self.c, self.h, self.w = input_right.shape
            self.fold = self.c // self.FOLD_DIV
        if self.center is None:
            self.center = input_right
            if input_right is not None and self.left_fold_2fold is None:
                self.left_fold_2fold = jnp.zeros(
                    (self.n, self.fold, self.h, self.w), input_right.dtype)
            return None
        if input_right is None:
            right = jnp.zeros((self.n, self.fold, self.h, self.w),
                              self.center.dtype)
        else:
            right = input_right
        shifted = jnp.concatenate(
            [right[:, :self.fold], self.left_fold_2fold,
             self.center[:, 2 * self.fold:]], axis=1)
        output = self.conv(shifted)
        self.left_fold_2fold = self.center[:, self.fold:2 * self.fold]
        self.center = input_right
        return output


class MemCvBlockJax:
    """(BiBufferConv => BN => ReLU) x 2, BN/ReLU fused into the conv kernels."""

    def __init__(self, in_ch, out_ch, key, backend):
        k1, k2 = jax.random.split(key)
        self.c1 = BiBufferConvJax(in_ch, out_ch, k1, backend=backend)
        self.c2 = BiBufferConvJax(out_ch, out_ch, k2, backend=backend)

    def __call__(self, x):
        return self.c2(self.c1(x))

    def reset(self):
        self.c1.reset()
        self.c2.reset()


class DownBlockJax:
    def __init__(self, in_ch, out_ch, key, backend):
        k1, k2 = jax.random.split(key)
        self.convblock = Conv2dBNAct(in_ch, out_ch, k1, stride=2,
                                     backend=backend)
        self.memconv = MemCvBlockJax(out_ch, out_ch, k2, backend)

    def __call__(self, x):
        if x is not None:
            x = self.convblock(x)
        return self.memconv(x)

    def reset(self):
        self.memconv.reset()


class InputCvBlockJax:
    def __init__(self, num_in_frames, out_ch, key, *, in_ch=4, interm_ch=30,
                 backend="pallas"):
        # TODO(synk): grouped conv for num_in_frames > 1 (this UNet uses 1).
        assert num_in_frames == 1
        k1, k2 = jax.random.split(key)
        self.conv1 = Conv2dBNAct(num_in_frames * in_ch,
                                 num_in_frames * interm_ch, k1, backend=backend)
        self.conv2 = Conv2dBNAct(num_in_frames * interm_ch, out_ch, k2,
                                 backend=backend)

    def __call__(self, x):
        if x is None:
            return None
        return self.conv2(self.conv1(x))


def _pixel_shuffle(x, r=2):
    n, c, h, w = x.shape
    x = x.reshape(n, c // (r * r), r, r, h, w)
    x = jnp.transpose(x, (0, 1, 4, 2, 5, 3))
    return x.reshape(n, c // (r * r), h * r, w * r)


class UpBlockJax:
    def __init__(self, in_ch, out_ch, key, backend):
        k1, k2 = jax.random.split(key)
        self.memconv = MemCvBlockJax(in_ch, in_ch, k1, backend)
        self.conv = Conv2dBNAct(in_ch, out_ch * 4, k2, bn=False, relu=False,
                                backend=backend)

    def __call__(self, x):
        x = self.memconv(x)
        if x is not None:
            x = _pixel_shuffle(self.conv(x), 2)
        return x

    def reset(self):
        self.memconv.reset()


class OutputCvBlockJax:
    def __init__(self, in_ch, out_ch, key, backend):
        k1, k2 = jax.random.split(key)
        self.conv1 = Conv2dBNAct(in_ch, in_ch, k1, backend=backend)
        self.conv2 = Conv2dBNAct(in_ch, out_ch, k2, bn=False, relu=False,
                                 out_dtype=jnp.float32, backend=backend)

    def __call__(self, x):
        if x is None:
            return None
        return self.conv2(self.conv1(x))


class MemSkipJax:
    def __init__(self):
        self.mem_list = []

    def push(self, x):
        if x is not None:
            self.mem_list.insert(0, x)
            return 1
        return 0

    def pop(self, x):
        if x is not None:
            return self.mem_list.pop()
        return None


class DenBlockJax:
    def __init__(self, key, chns=(32, 64, 128), out_ch=3, in_ch=4,
                 interm_ch=30, backend="pallas"):
        c0, c1, c2 = chns
        ks = jax.random.split(key, 6)
        self.inc = InputCvBlockJax(1, c0, ks[0], in_ch=in_ch,
                                   interm_ch=interm_ch, backend=backend)
        self.downc0 = DownBlockJax(c0, c1, ks[1], backend)
        self.downc1 = DownBlockJax(c1, c2, ks[2], backend)
        self.upc2 = UpBlockJax(c2, c1, ks[3], backend)
        self.upc1 = UpBlockJax(c1, c0, ks[4], backend)
        self.outc = OutputCvBlockJax(c0, out_ch, ks[5], backend)
        self.skip1, self.skip2, self.skip3 = (MemSkipJax(), MemSkipJax(),
                                              MemSkipJax())

    def reset(self):
        self.downc0.reset()
        self.downc1.reset()
        self.upc2.reset()
        self.upc1.reset()

    @staticmethod
    def _none_add(a, b):
        if a is None or b is None:
            return None
        return a + b

    @staticmethod
    def _none_minus(x1, x2):
        if x1 is None or x2 is None:
            return None
        head = x1[:, :3].astype(x2.dtype) - x2[:, :3]
        return jnp.concatenate([head, x2[:, 3:]], axis=1)

    def __call__(self, in1):
        self.skip1.push(None if in1 is None else in1[:, 0:3])
        x0 = self.inc(in1)
        self.skip2.push(x0)
        x1 = self.downc0(x0)
        self.skip3.push(x1)
        x2 = self.downc1(x1)
        x2 = self.upc2(x2)
        x1 = self.upc1(self._none_add(x2, self.skip3.pop(x2)))
        x = self.outc(self._none_add(x1, self.skip2.pop(x1)))
        return self._none_minus(self.skip1.pop(x), x)


class UNetJax:
    def __init__(self, key, backend="pallas"):
        self.temp1 = DenBlockJax(key, backend=backend)

    def __call__(self, x):
        return self.temp1(x)

    def reset(self):
        self.temp1.reset()


# ---------------------------------------------------------------------------
if __name__ == "__main__":
    root = jax.random.PRNGKey(0)
    kmodel, kdat1, kdat2, kc1, kc2 = jax.random.split(root, 5)

    # ----- unit checks: Pallas conv vs lax.conv on identical folded weights --
    N, C, H, W = 2, 32, 16, 16
    x_t = jax.random.normal(kdat1, (N, C, H, W), jnp.float32)

    s1_p = Conv2dBNAct(C, 32, kc1, stride=1, out_dtype=jnp.float32,
                       backend="pallas")
    s1_r = Conv2dBNAct(C, 32, kc1, stride=1, out_dtype=jnp.float32,
                       backend="ref")
    e1 = float(jnp.max(jnp.abs(jax.block_until_ready(s1_p(x_t)) - s1_r(x_t))))
    assert e1 < 2e-3, f"stride-1 conv mismatch: {e1}"

    s2_p = Conv2dBNAct(C, 64, kc2, stride=2, out_dtype=jnp.float32,
                       backend="pallas")
    s2_r = Conv2dBNAct(C, 64, kc2, stride=2, out_dtype=jnp.float32,
                       backend="ref")
    e2 = float(jnp.max(jnp.abs(jax.block_until_ready(s2_p(x_t)) - s2_r(x_t))))
    assert e2 < 2e-3, f"stride-2 (polyphase) conv mismatch: {e2}"

    # explicit H-tiled grid path (W=30 -> Wp=32; 4-row tiles = 128-lane blocks)
    x_w = jax.random.normal(kdat2, (N, C, 16, 30), jnp.float32)
    y_t = _conv2d_s1_pallas(x_w, s1_p.w_mat, s1_p.b_col, kernel_size=3,
                            padding=1, tile_h=4, relu=True,
                            out_dtype=jnp.float32)
    y_r = _conv2d_ref(x_w, s1_p.weight, s1_p.bias, stride=1, padding=1,
                      relu=True, out_dtype=jnp.float32)
    e3 = float(jnp.max(jnp.abs(jax.block_until_ready(y_t) - y_r)))
    assert e3 < 2e-3, f"tiled-path mismatch: {e3}"

    # ----- full UNet (DenBlock) streaming forward: Pallas vs reference -------
    unet_p = UNetJax(kmodel, backend="pallas")
    unet_r = UNetJax(kmodel, backend="ref")
    f_keys = jax.random.split(kdat1, 2)
    frames = [jax.random.normal(f_keys[i], (2, 4, 16, 16), jnp.float32)
              for i in range(2)]
    # The 8 BiBufferConvs along the down/up path give the stream an 8-frame
    # latency: feed the 2 real frames, then flush with None until both delayed
    # outputs have been emitted (exactly how the PyTorch module is driven).
    outs_p, outs_r = [], []
    for frame in frames + [None] * 8:
        op = unet_p(frame)
        orf = unet_r(frame)
        assert (op is None) == (orf is None)
        if op is not None:
            outs_p.append(jax.block_until_ready(op))
            outs_r.append(jax.block_until_ready(orf))
    assert len(outs_p) == 2, f"expected 2 streamed outputs, got {len(outs_p)}"
    for got, ref in zip(outs_p, outs_r):
        assert got.shape == (2, 3, 16, 16)
        err = float(jnp.max(jnp.abs(got - ref)))
        tol = 1e-1 + 5e-2 * float(jnp.max(jnp.abs(ref)))
        assert err < tol, f"UNet end-to-end mismatch: {err} (tol {tol})"

    print("KERNEL_OK")
</pallas_src>

<mosaic_0001>
module attributes {stable_mosaic.version = 11 : i64} {
  func.func @kernel(%arg0: i32, %arg1: i32, %arg2: memref<1x1x32x342xbf16, #tpu.memory_space<vmem>>, %arg3: memref<32x288xbf16, #tpu.memory_space<vmem>>, %arg4: memref<32x1xf32, #tpu.memory_space<vmem>>, %arg5: memref<1x32x288xf32, #tpu.memory_space<vmem>>) attributes {dimension_semantics = [#tpu.dimension_semantics<parallel>, #tpu.dimension_semantics<parallel>], iteration_bounds = array<i64: 2, 1>, scalar_prefetch = 0 : i64, scratch_operands = 0 : i64, tpu.core_type = #tpu.core_type<tc>, window_params = [{transform_indices = @transform_0, window_bounds = array<i64: 1, 1, 32, 342>}, {pipeline_mode = #tpu.pipeline_mode<synchronous>, transform_indices = @transform_1, window_bounds = array<i64: 32, 288>}, {pipeline_mode = #tpu.pipeline_mode<synchronous>, transform_indices = @transform_2, window_bounds = array<i64: 32, 1>}, {transform_indices = @transform_3, window_bounds = array<i64: 1, 32, 288>}]} {
    %c0 = arith.constant 0 : index
    %c0_0 = arith.constant 0 : index
    %c0_1 = arith.constant 0 : index
    %c0_2 = arith.constant 0 : index
    %0 = vector.load %arg2[%c0, %c0_0, %c0_1, %c0_2] : memref<1x1x32x342xbf16, #tpu.memory_space<vmem>>, vector<1x1x32x342xbf16>
    %1 = vector.shape_cast %0 : vector<1x1x32x342xbf16> to vector<32x342xbf16>
    %2 = vector.extract_strided_slice %1 {offsets = [0, 0], sizes = [32, 288], strides = [1, 1]} : vector<32x342xbf16> to vector<32x288xbf16>
    %3 = vector.extract_strided_slice %1 {offsets = [0, 1], sizes = [32, 288], strides = [1, 1]} : vector<32x342xbf16> to vector<32x288xbf16>
    %4 = vector.extract_strided_slice %1 {offsets = [0, 2], sizes = [32, 288], strides = [1, 1]} : vector<32x342xbf16> to vector<32x288xbf16>
    %5 = vector.extract_strided_slice %1 {offsets = [0, 18], sizes = [32, 288], strides = [1, 1]} : vector<32x342xbf16> to vector<32x288xbf16>
    %6 = vector.extract_strided_slice %1 {offsets = [0, 19], sizes = [32, 288], strides = [1, 1]} : vector<32x342xbf16> to vector<32x288xbf16>
    %7 = vector.extract_strided_slice %1 {offsets = [0, 20], sizes = [32, 288], strides = [1, 1]} : vector<32x342xbf16> to vector<32x288xbf16>
    %8 = vector.extract_strided_slice %1 {offsets = [0, 36], sizes = [32, 288], strides = [1, 1]} : vector<32x342xbf16> to vector<32x288xbf16>
    %9 = vector.extract_strided_slice %1 {offsets = [0, 37], sizes = [32, 288], strides = [1, 1]} : vector<32x342xbf16> to vector<32x288xbf16>
    %10 = vector.extract_strided_slice %1 {offsets = [0, 38], sizes = [32, 288], strides = [1, 1]} : vector<32x342xbf16> to vector<32x288xbf16>
    %11 = tpu.concatenate %2, %3, %4, %5, %6, %7, %8, %9, %10 in 0 : vector<32x288xbf16>, vector<32x288xbf16>, vector<32x288xbf16>, vector<32x288xbf16>, vector<32x288xbf16>, vector<32x288xbf16>, vector<32x288xbf16>, vector<32x288xbf16>, vector<32x288xbf16> -> vector<288x288xbf16>
    %c0_3 = arith.constant 0 : index
    %c0_4 = arith.constant 0 : index
    %12 = vector.load %arg3[%c0_3, %c0_4] : memref<32x288xbf16, #tpu.memory_space<vmem>>, vector<32x288xbf16>
    %cst = arith.constant dense<0.000000e+00> : vector<32x288xf32>
    %13 = tpu.matmul %12, %11, %cst {dimension_numbers = #tpu.dot_dimension_numbers<[1], [0], [0], [1], [0, 0, 1, 1], [], []>} : vector<32x288xbf16>, vector<288x288xbf16>, vector<32x288xf32> -> vector<32x288xf32>
    %c0_5 = arith.constant 0 : index
    %c0_6 = arith.constant 0 : index
    %14 = vector.load %arg4[%c0_5, %c0_6] : memref<32x1xf32, #tpu.memory_space<vmem>>, vector<32x1xf32>
    %15 = vector.broadcast %14 : vector<32x1xf32> to vector<32x288xf32>
    %16 = arith.addf %13, %15 : vector<32x288xf32>
    %cst_7 = arith.constant 0.000000e+00 : f32
    %17 = vector.broadcast %cst_7 : f32 to vector<32x288xf32>
    %18 = arith.maximumf %16, %17 : vector<32x288xf32>
    %c0_8 = arith.constant 0 : index
    %c0_9 = arith.constant 0 : index
    %c0_10 = arith.constant 0 : index
    %19 = vector.load %arg5[%c0_8, %c0_9, %c0_10] : memref<1x32x288xf32, #tpu.memory_space<vmem>>, vector<1x32x288xf32>
    %20 = vector.shape_cast %19 : vector<1x32x288xf32> to vector<32x288xf32>
    %21 = vector.shape_cast %18 : vector<32x288xf32> to vector<1x32x288xf32>
    tpu.vector_store %arg5[%c0_8, %c0_9, %c0_10], %21 {strides = array<i32>} : memref<1x32x288xf32, #tpu.memory_space<vmem>>, vector<1x32x288xf32>,
    return
  }
  func.func @transform_0(%arg0: i32, %arg1: i32) -> (i32, i32, i32, i32) {
    %c0_i32 = arith.constant 0 : i32
    %c0_i32_0 = arith.constant 0 : i32
    %c0_i32_1 = arith.constant 0 : i32
    return %arg0, %arg1, %c0_i32, %c0_i32_0 : i32, i32, i32, i32
  }
  func.func @transform_1(%arg0: i32, %arg1: i32) -> (i32, i32) {
    %c0_i32 = arith.constant 0 : i32
    %c0_i32_0 = arith.constant 0 : i32
    %c0_i32_1 = arith.constant 0 : i32
    return %c0_i32, %c0_i32_0 : i32, i32
  }
  func.func @transform_2(%arg0: i32, %arg1: i32) -> (i32, i32) {
    %c0_i32 = arith.constant 0 : i32
    %c0_i32_0 = arith.constant 0 : i32
    %c0_i32_1 = arith.constant 0 : i32
    return %c0_i32, %c0_i32_0 : i32, i32
  }
  func.func @transform_3(%arg0: i32, %arg1: i32) -> (i32, i32, i32) {
    %c0_i32 = arith.constant 0 : i32
    %c0_i32_0 = arith.constant 0 : i32
    return %arg0, %c0_i32, %arg1 : i32, i32, i32
  }
}

</mosaic_0001>

<llo_original>
// kernel: _conv2d_s1_pallas.1
$region0: #{_conv2d_s1_pallas.1}
  #allocation0 [shape = 'u32[]', space=smem, size = 0x4, offset = 0x4, fixed_abs, tag = 'smem constant byte address 0x4 - core index']
  #allocation1 [shape = 'u32[144,128]{1,0:T(1,128)}', space=vmem, size = 0x12000, scoped, tag = 'internal scratch']
  %s0 = inlined_call_operand.vmem [shape: bf16[2,1,32,342], index: 0, kind: input, shape index: {}]
  %s1 = inlined_call_operand.vmem [shape: bf16[32,288], index: 1, kind: input, shape index: {}]
  %s2 = inlined_call_operand.vmem [shape: f32[32,1], index: 2, kind: input, shape index: {}]
  %s3 = inlined_call_operand.vmem [shape: f32[2,32,288], index: 3, kind: output, shape index: {}]
  %s4 = sld [smem:[#allocation0]]
  $region45: #{_conv2d_s1_pallas.1} parent=0
    _
  %s6 = ssub.s32 1, %s4
  %s7 = scalar_select 0, %s6, %s4
  loop: start=0, step=1, limit=4
  $region2: #{_conv2d_s1_pallas.1} parent=0 // loop_pre_header
    _
  $region3: #{_conv2d_s1_pallas.1} parent=0 // loop_header
    %s9 = sphi 0, %s13
    %p10 = scmp.ge.s32.totalorder %s9, 4
    %s16 = sphi 0, %s28
    %s17 = sphi 0, %s24
    %s18 = sphi 0, %s16
    %s19 = sphi 0, %s17
    %s20 = sphi 0, %s18
    %s21 = sphi 0, %s19
    %s33 = sphi 0, %s35
    %s36 = sphi 0, %s33
    %s37 = sphi 0, %s36
    %s53 = sphi 0, %s37
    %s57 = sphi 0, %s57
    %s59 = sphi 0, %s57
    %s60 = sphi 0, %s59
    %s74 = sphi 0, %s60
    %s78 = sphi 0, %s78
    %s80 = sphi 0, %s78
    %s81 = sphi 0, %s80
    %s95 = sphi 0, %s81
    %s103 = sphi 0, %s105
    %s106 = sphi 0, %s103
    %s107 = sphi 0, %s106
    %s123 = sphi 0, %s107
  $region4: #{_conv2d_s1_pallas.1} parent=0 // loop_header_branch
    %12 = sbr.rel (%p10) target = $region8
  $region5: #{_conv2d_s1_pallas.1} parent=0 // loop_body
    %s14 = ssub.s32 %s9, 1
    %s15 = ssub.s32 %s9, 2
    %s22 = sadd.s32 1, %s17
    %p23 = scmp.ge.s32.totalorder %s22, 1
    %s24 = scalar_select %p23, 0, %s22
    %s25 = sadd.s32 1, %s16
    %s26 = scalar_select %p23, %s25, %s16
    %p27 = scmp.ge.s32.totalorder %s26, 2
    %s28 = scalar_select %p27, 0, %s26
    %s29 = ssub.s32 %s16, %s28
    %s30 = ssub.s32 %s17, %s24
    %s31 = sor.u32 %s29, %s30
    %p32 = scmp.eq.s32.totalorder %s31, 0
    %s34 = sadd.s32 %s33, 1
    %s35 = scalar_select %p32, %s33, %s34
    %p38 = pneg %p32
    %p39 = scmp.eq.s32.totalorder %s9, 1
    %p40 = por %p38, %p39
    %p41 = scmp.ne.s32.totalorder %s33, %s36
    %p42 = scmp.eq.s32.totalorder %s9, 0
    %p43 = por %p41, %p42
    %p44 = scmp.ne.s32.totalorder %s33, %s36
    %p45 = scmp.eq.s32.totalorder %s14, 1
    %p46 = por %p44, %p45
    %p47 = scmp.ne.s32.totalorder %s36, %s37
    %p48 = scmp.eq.s32.totalorder %s14, 0
    %p49 = por %p47, %p48
    %p50 = scmp.ne.s32.totalorder %s36, %s37
    %p51 = scmp.eq.s32.totalorder %s15, 1
    %p52 = por %p50, %p51
    %p54 = scmp.ne.s32.totalorder %s37, %s53
    %p55 = scmp.eq.s32.totalorder %s15, 0
    %p56 = por %p54, %p55
    %s58 = sadd.s32 %s57, 1
    %p61 = scmp.eq.s32.totalorder %s9, 1
    %p62 = scmp.ne.s32.totalorder %s57, %s59
    %p63 = scmp.eq.s32.totalorder %s9, 0
    %p64 = por %p62, %p63
    %p65 = scmp.ne.s32.totalorder %s57, %s59
    %p66 = scmp.eq.s32.totalorder %s14, 1
    %p67 = por %p65, %p66
    %p68 = scmp.ne.s32.totalorder %s59, %s60
    %p69 = scmp.eq.s32.totalorder %s14, 0
    %p70 = por %p68, %p69
    %p71 = scmp.ne.s32.totalorder %s59, %s60
    %p72 = scmp.eq.s32.totalorder %s15, 1
    %p73 = por %p71, %p72
    %p75 = scmp.ne.s32.totalorder %s60, %s74
    %p76 = scmp.eq.s32.totalorder %s15, 0
    %p77 = por %p75, %p76
    %s79 = sadd.s32 %s78, 1
    %p82 = scmp.eq.s32.totalorder %s9, 1
    %p83 = scmp.ne.s32.totalorder %s78, %s80
    %p84 = scmp.eq.s32.totalorder %s9, 0
    %p85 = por %p83, %p84
    %p86 = scmp.ne.s32.totalorder %s78, %s80
    %p87 = scmp.eq.s32.totalorder %s14, 1
    %p88 = por %p86, %p87
    %p89 = scmp.ne.s32.totalorder %s80, %s81
    %p90 = scmp.eq.s32.totalorder %s14, 0
    %p91 = por %p89, %p90
    %p92 = scmp.ne.s32.totalorder %s80, %s81
    %p93 = scmp.eq.s32.totalorder %s15, 1
    %p94 = por %p92, %p93
    %p96 = scmp.ne.s32.totalorder %s81, %s95
    %p97 = scmp.eq.s32.totalorder %s15, 0
    %p98 = por %p96, %p97
    %s99 = ssub.s32 %s16, %s28
    %s100 = ssub.s32 %s17, %s24
    %s101 = sor.u32 %s99, %s100
    %p102 = scmp.eq.s32.totalorder %s101, 0
    %s104 = sadd.s32 %s103, 1
    %s105 = scalar_select %p102, %s103, %s104
    %p108 = pneg %p102
    %p109 = scmp.eq.s32.totalorder %s9, 1
    %p110 = por %p108, %p109
    %p111 = scmp.ne.s32.totalorder %s103, %s106
    %p112 = scmp.eq.s32.totalorder %s9, 0
    %p113 = por %p111, %p112
    %p114 = scmp.ne.s32.totalorder %s103, %s106
    %p115 = scmp.eq.s32.totalorder %s14, 1
    %p116 = por %p114, %p115
    %p117 = scmp.ne.s32.totalorder %s106, %s107
    %p118 = scmp.eq.s32.totalorder %s14, 0
    %p119 = por %p117, %p118
    %p120 = scmp.ne.s32.totalorder %s106, %s107
    %p121 = scmp.eq.s32.totalorder %s15, 1
    %p122 = por %p120, %p121
    %p124 = scmp.ne.s32.totalorder %s107, %s123
    %p125 = scmp.eq.s32.totalorder %s15, 0
    %p126 = por %p124, %p125
    %p127 = scmp.le.s32.totalorder 1, %s9
    %p128 = scmp.lt.s32.totalorder %s9, 3
    %p129 = pnand %p127, %p128
    %p130 = pneg %p129
    // Predicated region
    $region9: #{_conv2d_s1_pallas.1} parent=5 // pred_check
      _
    $region10: #{_conv2d_s1_pallas.1} parent=5 // pred_check_branch
      %132 = sbr.rel (%p129) target = $region12
    $region11: #{_conv2d_s1_pallas.1} parent=5 // pred_region
      %s133 = ssub.s32 %s9, 1
      // Predicated region
      $region13: #{_conv2d_s1_pallas.1} parent=11 // pred_check
        %p134 = pneg %p70
      $region14: #{_conv2d_s1_pallas.1} parent=11 // pred_check_branch
        %136 = sbr.rel (%p134) target = $region16
      $region15: #{_conv2d_s1_pallas.1} parent=11 // pred_region
        _
      $region16: #{_conv2d_s1_pallas.1} parent=11 // pred_fallthru
        _
      // Predicated region
      $region17: #{_conv2d_s1_pallas.1} parent=11 // pred_check
        %p137 = pneg %p91
      $region18: #{_conv2d_s1_pallas.1} parent=11 // pred_check_branch
        %139 = sbr.rel (%p137) target = $region20
      $region19: #{_conv2d_s1_pallas.1} parent=11 // pred_region
        _
      $region20: #{_conv2d_s1_pallas.1} parent=11 // pred_fallthru
        _
    $region12: #{_conv2d_s1_pallas.1} parent=5 // pred_fallthru
      _
    %p140 = scmp.lt.s32.totalorder %s9, 2
    // Predicated region
    $region21: #{_conv2d_s1_pallas.1} parent=5 // pred_check
      %p141 = pneg %p140
    $region22: #{_conv2d_s1_pallas.1} parent=5 // pred_check_branch
      %143 = sbr.rel (%p141) target = $region24
    $region23: #{_conv2d_s1_pallas.1} parent=5 // pred_region
      // Predicated region
      $region25: #{_conv2d_s1_pallas.1} parent=23 // pred_check
        %p144 = pneg %p43
      $region26: #{_conv2d_s1_pallas.1} parent=23 // pred_check_branch
        %146 = sbr.rel (%p144) target = $region28
      $region27: #{_conv2d_s1_pallas.1} parent=23 // pred_region
        %p147 = scmp.lt.s32.totalorder %s16, 1
        %s148 = scalar_select %p147, %s16, 1
        %p149 = scmp.lt.s32.totalorder %s17, 0
        %s150 = scalar_select %p149, %s17, 0
        %s151 = smul.addr %s150, 12
        %s152 = smul.addr %s148, 12
        %s153 = sadd.s32 %s151, %s152
        %s154 = smul.addr %s153, 4
        %s155 = scalar_lea.vmem %s0, %s154
      $region28: #{_conv2d_s1_pallas.1} parent=23 // pred_fallthru
        _
    $region24: #{_conv2d_s1_pallas.1} parent=5 // pred_fallthru
      _
    %p156 = scmp.le.s32.totalorder 1, %s9
    %p157 = scmp.lt.s32.totalorder %s9, 3
    %p158 = pnand %p156, %p157
    %p159 = pneg %p158
    // Predicated region
    $region29: #{_conv2d_s1_pallas.1} parent=5 // pred_check
      _
    $region30: #{_conv2d_s1_pallas.1} parent=5 // pred_check_branch
      %161 = sbr.rel (%p158) target = $region32
    $region31: #{_conv2d_s1_pallas.1} parent=5 // pred_region
      %s162 = ssub.s32 %s9, 1
      %p163 = scmp.lt.s32.totalorder %s18, 1
      %s164 = scalar_select %p163, %s18, 1
      %p165 = scmp.lt.s32.totalorder %s19, 0
      %s166 = scalar_select %p165, %s19, 0
      %s167 = smul.addr %s166, 12
      %s168 = smul.addr %s164, 12
      %s169 = sadd.s32 %s167, %s168
      %s170 = smul.addr %s169, 4
      %s171 = scalar_lea.vmem %s0, %s170
      %p172 = pneg %p49
      %p173 = pneg %p46
      %p174 = pneg %p70
      %p175 = pneg %p67
      %p176 = pneg %p91
      %p177 = pneg %p88
      %p178 = pneg %p119
      %p179 = pneg %p116
      %s180 = smul.u32 3, %s19
      %p181 = scmp.lt.s32.totalorder %s18, 1
      %s182 = scalar_select %p181, %s18, 1
      %p183 = scmp.lt.s32.totalorder %s180, 2
      %s184 = scalar_select %p183, %s180, 2
      %s185 = smul.addr %s182, 12
      %s186 = sadd.s32 %s184, %s185
      %s187 = smul.addr %s186, 8
      %s188 = scalar_lea.vmem %s3, %s187
      %p189 = scmp.lt.s32.totalorder %s18, 1
      %s190 = scalar_select %p189, %s18, 1
      %p191 = scmp.lt.s32.totalorder %s19, 0
      %s192 = scalar_select %p191, %s19, 0
      %s193 = smul.addr %s192, 12
      %s194 = smul.addr %s190, 12
      %s195 = sadd.s32 %s193, %s194
      %s196 = smul.addr %s195, 4
      %s197 = scalar_lea.vmem %s0, %s196
      %s198 = smul.u32 3, %s19
      %p199 = scmp.lt.s32.totalorder %s18, 1
      %s200 = scalar_select %p199, %s18, 1
      %p201 = scmp.lt.s32.totalorder %s198, 2
      %s202 = scalar_select %p201, %s198, 2
      %s203 = smul.addr %s200, 12
      %s204 = sadd.s32 %s202, %s203
      %s205 = smul.addr %s204, 8
      %s206 = scalar_lea.vmem %s3, %s205
      %s207 = smul.u32 3, %s19
      %v209 = vld [vmem:[%s197] sm:$0xff]
      %v210 = vld [vmem:[%s197 + $0x8] sm:$0xf]
      %v211 = vld [vmem:[%s197 + $0xc] sm:$0xff]
      %v212 = vld [vmem:[%s197 + $0x14] sm:$0xf]
      %v213 = vld [vmem:[%s197 + $0x18] sm:$0xff]
      %v214 = vld [vmem:[%s197 + $0x20] sm:$0xf]
      %v215 = vld [vmem:[%s197 + $0x24] sm:$0xff]
      %v216 = vld [vmem:[%s197 + $0x2c] sm:$0xf]
      %v225 = vunpack.c.l.b16 %v209
      %v226 = vunpack.c.h.b16 %v209
      %v227 = vunpack.c.l.b16 %v210
      %v228 = vunpack.c.l.b16 %v211
      %v229 = vunpack.c.h.b16 %v211
      %v230 = vunpack.c.l.b16 %v212
      %v231 = vunpack.c.l.b16 %v213
      %v232 = vunpack.c.h.b16 %v213
      %v233 = vunpack.c.l.b16 %v214
      %v234 = vunpack.c.l.b16 %v215
      %v235 = vunpack.c.h.b16 %v215
      %v236 = vunpack.c.l.b16 %v216
      %v237 = vpack.c.b16 %v228, %v225
      %v238 = vpack.c.b16 %v229, %v226
      %v239 = vpack.c.b16 %v230, %v227
      %v240 = vpack.c.b16 %v234, %v231
      %v241 = vpack.c.b16 %v235, %v232
      %v242 = vpack.c.b16 %v236, %v233
      %249 = vrot.lane.b32.xlu0 %v237, 127
      %v250 = vpop.permute.xlu0 %249
      %251 = vrot.lane.b32.xlu0 %v238, 127
      %v252 = vpop.permute.xlu0 %251
      %253 = vrot.lane.b32.xlu0 %v239, 127
      %v254 = vpop.permute.xlu0 %253
      %255 = vrot.lane.b32.xlu0 %v240, 127
      %v256 = vpop.permute.xlu0 %255
      %257 = vrot.lane.b32.xlu0 %v241, 127
      %v258 = vpop.permute.xlu0 %257
      %259 = vrot.lane.b32.xlu0 %v242, 127
      %v260 = vpop.permute.xlu0 %259
      %vm261 = vcmask 1039360
      %v262 = vsel %vm261, %v250, %v252
      %v263 = vsel %vm261, %v252, %v254
      %v264 = vsel %vm261, %v256, %v258
      %v265 = vsel %vm261, %v258, %v260
      %272 = vrot.lane.b32.xlu0 %v237, 126
      %v273 = vpop.permute.xlu0 %272
      %274 = vrot.lane.b32.xlu0 %v238, 126
      %v275 = vpop.permute.xlu0 %274
      %276 = vrot.lane.b32.xlu0 %v239, 126
      %v277 = vpop.permute.xlu0 %276
      %278 = vrot.lane.b32.xlu0 %v240, 126
      %v279 = vpop.permute.xlu0 %278
      %280 = vrot.lane.b32.xlu0 %v241, 126
      %v281 = vpop.permute.xlu0 %280
      %282 = vrot.lane.b32.xlu0 %v242, 126
      %v283 = vpop.permute.xlu0 %282
      %vm284 = vcmask 1031168
      %v285 = vsel %vm284, %v273, %v275
      %v286 = vsel %vm284, %v275, %v277
      %v287 = vsel %vm284, %v279, %v281
      %v288 = vsel %vm284, %v281, %v283
      %295 = vrot.lane.b32.xlu0 %v237, 110
      %v296 = vpop.permute.xlu0 %295
      %297 = vrot.lane.b32.xlu0 %v238, 110
      %v298 = vpop.permute.xlu0 %297
      %299 = vrot.lane.b32.xlu0 %v239, 110
      %v300 = vpop.permute.xlu0 %299
      %301 = vrot.lane.b32.xlu0 %v240, 110
      %v302 = vpop.permute.xlu0 %301
      %303 = vrot.lane.b32.xlu0 %v241, 110
      %v304 = vpop.permute.xlu0 %303
      %305 = vrot.lane.b32.xlu0 %v242, 110
      %v306 = vpop.permute.xlu0 %305
      %vm307 = vcmask 900096
      %v308 = vsel %vm307, %v296, %v298
      %v309 = vsel %vm307, %v298, %v300
      %v310 = vsel %vm307, %v302, %v304
      %v311 = vsel %vm307, %v304, %v306
      %318 = vrot.lane.b32.xlu0 %v237, 109
      %v319 = vpop.permute.xlu0 %318
      %320 = vrot.lane.b32.xlu0 %v238, 109
      %v321 = vpop.permute.xlu0 %320
      %322 = vrot.lane.b32.xlu0 %v239, 109
      %v323 = vpop.permute.xlu0 %322
      %324 = vrot.lane.b32.xlu0 %v240, 109
      %v325 = vpop.permute.xlu0 %324
      %326 = vrot.lane.b32.xlu0 %v241, 109
      %v327 = vpop.permute.xlu0 %326
      %328 = vrot.lane.b32.xlu0 %v242, 109
      %v329 = vpop.permute.xlu0 %328
      %vm330 = vcmask 891904
      %v331 = vsel %vm330, %v319, %v321
      %v332 = vsel %vm330, %v321, %v323
      %v333 = vsel %vm330, %v325, %v327
      %v334 = vsel %vm330, %v327, %v329
      %341 = vrot.lane.b32.xlu0 %v237, 108
      %v342 = vpop.permute.xlu0 %341
      %343 = vrot.lane.b32.xlu0 %v238, 108
      %v344 = vpop.permute.xlu0 %343
      %345 = vrot.lane.b32.xlu0 %v239, 108
      %v346 = vpop.permute.xlu0 %345
      %347 = vrot.lane.b32.xlu0 %v240, 108
      %v348 = vpop.permute.xlu0 %347
      %349 = vrot.lane.b32.xlu0 %v241, 108
      %v350 = vpop.permute.xlu0 %349
      %351 = vrot.lane.b32.xlu0 %v242, 108
      %v352 = vpop.permute.xlu0 %351
      %vm353 = vcmask 883712
      %v354 = vsel %vm353, %v342, %v344
      %v355 = vsel %vm353, %v344, %v346
      %v356 = vsel %vm353, %v348, %v350
      %v357 = vsel %vm353, %v350, %v352
      %364 = vrot.lane.b32.xlu0 %v237, 92
      %v365 = vpop.permute.xlu0 %364
      %366 = vrot.lane.b32.xlu0 %v238, 92
      %v367 = vpop.permute.xlu0 %366
      %368 = vrot.lane.b32.xlu0 %v239, 92
      %v369 = vpop.permute.xlu0 %368
      %370 = vrot.lane.b32.xlu0 %v240, 92
      %v371 = vpop.permute.xlu0 %370
      %372 = vrot.lane.b32.xlu0 %v241, 92
      %v373 = vpop.permute.xlu0 %372
      %374 = vrot.lane.b32.xlu0 %v242, 92
      %v375 = vpop.permute.xlu0 %374
      %vm376 = vcmask 752640
      %v377 = vsel %vm376, %v365, %v367
      %v378 = vsel %vm376, %v367, %v369
      %v379 = vsel %vm376, %v371, %v373
      %v380 = vsel %vm376, %v373, %v375
      %387 = vrot.lane.b32.xlu0 %v237, 91
      %v388 = vpop.permute.xlu0 %387
      %389 = vrot.lane.b32.xlu0 %v238, 91
      %v390 = vpop.permute.xlu0 %389
      %391 = vrot.lane.b32.xlu0 %v239, 91
      %v392 = vpop.permute.xlu0 %391
      %393 = vrot.lane.b32.xlu0 %v240, 91
      %v394 = vpop.permute.xlu0 %393
      %395 = vrot.lane.b32.xlu0 %v241, 91
      %v396 = vpop.permute.xlu0 %395
      %397 = vrot.lane.b32.xlu0 %v242, 91
      %v398 = vpop.permute.xlu0 %397
      %vm399 = vcmask 744448
      %v400 = vsel %vm399, %v388, %v390
      %v401 = vsel %vm399, %v390, %v392
      %v402 = vsel %vm399, %v394, %v396
      %v403 = vsel %vm399, %v396, %v398
      %410 = vrot.lane.b32.xlu0 %v237, 90
      %v411 = vpop.permute.xlu0 %410
      %412 = vrot.lane.b32.xlu0 %v238, 90
      %v413 = vpop.permute.xlu0 %412
      %414 = vrot.lane.b32.xlu0 %v239, 90
      %v415 = vpop.permute.xlu0 %414
      %416 = vrot.lane.b32.xlu0 %v240, 90
      %v417 = vpop.permute.xlu0 %416
      %418 = vrot.lane.b32.xlu0 %v241, 90
      %v419 = vpop.permute.xlu0 %418
      %420 = vrot.lane.b32.xlu0 %v242, 90
      %v421 = vpop.permute.xlu0 %420
      %vm422 = vcmask 736256
      %v423 = vsel %vm422, %v411, %v413
      %v424 = vsel %vm422, %v413, %v415
      %v425 = vsel %vm422, %v417, %v419
      %v426 = vsel %vm422, %v419, %v421
      %v433 = vld [vmem:[%s1] sm:$0xff]
      %v434 = vld [vmem:[%s1 + $0x8] sm:$0xf]
      %v435 = vld [vmem:[%s1 + $0xc] sm:$0xff]
      %v436 = vld [vmem:[%s1 + $0x14] sm:$0xf]
      %v437 = vld [vmem:[%s1 + $0x18] sm:$0xff]
      %v438 = vld [vmem:[%s1 + $0x20] sm:$0xf]
      %v439 = vld [vmem:[%s1 + $0x24] sm:$0xff]
      %v440 = vld [vmem:[%s1 + $0x2c] sm:$0xf]
      %v441 = vld [vmem:[%s2] sm:$0xff]
      %v442 = vld [vmem:[%s2 + $0x8] sm:$0xff]
      %v443 = vld [vmem:[%s2 + $0x10] sm:$0xff]
      %v444 = vld [vmem:[%s2 + $0x18] sm:$0xff]
      %446 = vset.pattern.permute.xlu0 0
      %447 = vperm.xlu0 %446, %v441
      %v448 = vpop.permute.xlu0 %447
      %451 = vset.pattern.permute.xlu0 0
      %452 = vperm.xlu0 %451, %v442
      %v453 = vpop.permute.xlu0 %452
      %456 = vset.pattern.permute.xlu0 0
      %457 = vperm.xlu0 %456, %v443
      %v458 = vpop.permute.xlu0 %457
      %461 = vset.pattern.permute.xlu0 0
      %462 = vperm.xlu0 %461, %v444
      %v463 = vpop.permute.xlu0 %462
      %v473 = vunpack.c.l.b16 %v433
      %v474 = vunpack.c.h.b16 %v433
      %v475 = vunpack.c.l.b16 %v434
      %v476 = vunpack.c.l.b16 %v435
      %v477 = vunpack.c.h.b16 %v435
      %v478 = vunpack.c.l.b16 %v436
      %v479 = vunpack.c.l.b16 %v437
      %v480 = vunpack.c.h.b16 %v437
      %v481 = vunpack.c.l.b16 %v438
      %v482 = vunpack.c.l.b16 %v439
      %v483 = vunpack.c.h.b16 %v439
      %v484 = vunpack.c.l.b16 %v440
      %v485 = vpack.c.b16 %v476, %v473
      %v486 = vpack.c.b16 %v477, %v474
      %v487 = vpack.c.b16 %v478, %v475
      %v488 = vpack.c.b16 %v482, %v479
      %v489 = vpack.c.b16 %v483, %v480
      %v490 = vpack.c.b16 %v484, %v481
      %vm495 = vcmask 261120
      %v497 = vsel %vm495, %v487, 0
      %v500 = vsel %vm495, %v490, 0
      %502 = vmatprep.subr.bf16.mxu0 %v311
      %503 = vmatpush1.bf16.msra.mxu0 %v310
      %504 = vmatprep.subr.bf16.mxu0 %v309
      %505 = vmatpush1.bf16.msra.mxu0 %v308
      %506 = vmatprep.subr.bf16.mxu0 %v288
      %507 = vmatpush1.bf16.msra.mxu0 %v287
      %508 = vmatprep.subr.bf16.mxu0 %v286
      %509 = vmatpush1.bf16.msra.mxu0 %v285
      %510 = vmatprep.subr.bf16.mxu0 %v265
      %511 = vmatpush1.bf16.msra.mxu0 %v264
      %512 = vmatprep.subr.bf16.mxu0 %v263
      %513 = vmatpush1.bf16.msra.mxu0 %v262
      %514 = vmatprep.subr.bf16.mxu0 %v241
      %515 = vmatpush1.bf16.msra.mxu0 %v240
      %516 = vmatprep.subr.bf16.mxu0 %v238
      %517 = vmatpush1.bf16.msra.mxu0 %v237
      %518 = vmatprep.subr.bf16.mxu0 %v403
      %519 = vmatpush2.bf16.msra.mxu0 %v402
      %520 = vmatprep.subr.bf16.mxu0 %v401
      %521 = vmatpush2.bf16.msra.mxu0 %v400
      %522 = vmatprep.subr.bf16.mxu0 %v380
      %523 = vmatpush2.bf16.msra.mxu0 %v379
      %524 = vmatprep.subr.bf16.mxu0 %v378
      %525 = vmatpush2.bf16.msra.mxu0 %v377
      %526 = vmatprep.subr.bf16.mxu0 %v357
      %527 = vmatpush2.bf16.msra.mxu0 %v356
      %528 = vmatprep.subr.bf16.mxu0 %v355
      %529 = vmatpush2.bf16.msra.mxu0 %v354
      %530 = vmatprep.subr.bf16.mxu0 %v334
      %531 = vmatpush2.bf16.msra.mxu0 %v333
      %532 = vmatprep.subr.bf16.mxu0 %v332
      %533 = vmatpush2.bf16.msra.mxu0 %v331
      %534 = vmatprep.mubr.bf16.mxu0 %v486
      %535 = vmatmul.mubr.bf16.gmra.mxu0 %v485
      %v536 = vpop.f32.mrf.mxu0
      %v537 = vadd.f32 %v448, %v536
      %v538 = vpop.f32.mrf.mxu0
      %v539 = vadd.f32 %v448, %v538
      %v540 = vpop.f32.mrf.mxu0
      %v541 = vadd.f32 %v453, %v540
      %v542 = vpop.f32.mrf.mxu0
      %v543 = vadd.f32 %v453, %v542
      %544 = vmatprep.mubr.bf16.mxu0 %v489
      %545 = vmatmul.mubr.bf16.gmra.mxu0 %v488
      %v546 = vpop.f32.mrf.mxu0
      %v547 = vadd.f32 %v458, %v546
      %v548 = vpop.f32.mrf.mxu0
      %v549 = vadd.f32 %v458, %v548
      %v550 = vpop.f32.mrf.mxu0
      %v551 = vadd.f32 %v463, %v550
      %v552 = vpop.f32.mrf.mxu0
      %v553 = vadd.f32 %v463, %v552
      %554 = vdwg.mxu0
      %555 = vmatprep.subr.bf16.mxu0 0
      %556 = vmatpush1.bf16.msra.mxu0 0
      %557 = vmatprep.subr.bf16.mxu0 0
      %558 = vmatpush1.bf16.msra.mxu0 0
      %559 = vmatprep.subr.bf16.mxu0 0
      %560 = vmatpush1.bf16.msra.mxu0 0
      %561 = vmatprep.subr.bf16.mxu0 0
      %562 = vmatpush1.bf16.msra.mxu0 0
      %563 = vmatprep.subr.bf16.mxu0 0
      %564 = vmatpush1.bf16.msra.mxu0 0
      %565 = vmatprep.subr.bf16.mxu0 0
      %566 = vmatpush1.bf16.msra.mxu0 0
      %567 = vmatprep.subr.bf16.mxu0 %v426
      %568 = vmatpush1.bf16.msra.mxu0 %v425
      %569 = vmatprep.subr.bf16.mxu0 %v424
      %570 = vmatpush1.bf16.msra.mxu0 %v423
      %571 = vmatprep.subr.bf16.mxu0 0
      %572 = vmatpush2.bf16.msra.mxu0 0
      %573 = vmatprep.subr.bf16.mxu0 0
      %574 = vmatpush2.bf16.msra.mxu0 0
      %575 = vmatprep.subr.bf16.mxu0 0
      %576 = vmatpush2.bf16.msra.mxu0 0
      %577 = vmatprep.subr.bf16.mxu0 0
      %578 = vmatpush2.bf16.msra.mxu0 0
      %579 = vmatprep.subr.bf16.mxu0 0
      %580 = vmatpush2.bf16.msra.mxu0 0
      %581 = vmatprep.subr.bf16.mxu0 0
      %582 = vmatpush2.bf16.msra.mxu0 0
      %583 = vmatprep.subr.bf16.mxu0 0
      %584 = vmatpush2.bf16.msra.mxu0 0
      %585 = vmatprep.subr.bf16.mxu0 0
      %586 = vmatpush2.bf16.msra.mxu0 0
      %587 = vmatprep.mubr.bf16.mxu0 0
      %588 = vmatmul.mubr.bf16.gmra.mxu0 %v497
      %v589 = vpop.f32.mrf.mxu0
      %v590 = vadd.f32 %v537, %v589
      %v591 = vpop.f32.mrf.mxu0
      %v592 = vadd.f32 %v539, %v591
      %v593 = vpop.f32.mrf.mxu0
      %v594 = vadd.f32 %v541, %v593
      %v595 = vpop.f32.mrf.mxu0
      %v596 = vadd.f32 %v543, %v595
      %597 = vmatprep.mubr.bf16.mxu0 0
      %598 = vmatmul.mubr.bf16.gmra.mxu0 %v500
      %v599 = vpop.f32.mrf.mxu0
      %v600 = vadd.f32 %v547, %v599
      %v601 = vpop.f32.mrf.mxu0
      %v602 = vadd.f32 %v549, %v601
      %v603 = vpop.f32.mrf.mxu0
      %v604 = vadd.f32 %v551, %v603
      %v605 = vpop.f32.mrf.mxu0
      %v606 = vadd.f32 %v553, %v605
      %607 = vdwg.mxu0
      %608 = vmatprep.subr.bf16.mxu0 0
      %609 = vmatpush1.bf16.msra.mxu0 %v306
      %610 = vmatprep.subr.bf16.mxu0 0
      %611 = vmatpush1.bf16.msra.mxu0 %v300
      %612 = vmatprep.subr.bf16.mxu0 0
      %613 = vmatpush1.bf16.msra.mxu0 %v283
      %614 = vmatprep.subr.bf16.mxu0 0
      %615 = vmatpush1.bf16.msra.mxu0 %v277
      %616 = vmatprep.subr.bf16.mxu0 0
      %617 = vmatpush1.bf16.msra.mxu0 %v260
      %618 = vmatprep.subr.bf16.mxu0 0
      %619 = vmatpush1.bf16.msra.mxu0 %v254
      %620 = vmatprep.subr.bf16.mxu0 0
      %621 = vmatpush1.bf16.msra.mxu0 %v242
      %622 = vmatprep.subr.bf16.mxu0 0
      %623 = vmatpush1.bf16.msra.mxu0 %v239
      %624 = vmatprep.subr.bf16.mxu0 0
      %625 = vmatpush2.bf16.msra.mxu0 %v398
      %626 = vmatprep.subr.bf16.mxu0 0
      %627 = vmatpush2.bf16.msra.mxu0 %v392
      %628 = vmatprep.subr.bf16.mxu0 0
      %629 = vmatpush2.bf16.msra.mxu0 %v375
      %630 = vmatprep.subr.bf16.mxu0 0
      %631 = vmatpush2.bf16.msra.mxu0 %v369
      %632 = vmatprep.subr.bf16.mxu0 0
      %633 = vmatpush2.bf16.msra.mxu0 %v352
      %634 = vmatprep.subr.bf16.mxu0 0
      %635 = vmatpush2.bf16.msra.mxu0 %v346
      %636 = vmatprep.subr.bf16.mxu0 0
      %637 = vmatpush2.bf16.msra.mxu0 %v329
      %638 = vmatprep.subr.bf16.mxu0 0
      %639 = vmatpush2.bf16.msra.mxu0 %v323
      %640 = vmatprep.mubr.bf16.mxu0 %v486
      %641 = vmatmul.mubr.bf16.gmra.mxu0 %v485
      %v642 = vpop.f32.mrf.mxu0
      %v643 = vadd.f32 %v448, %v642
      %v644 = vpop.f32.mrf.mxu0
      %v645 = vpop.f32.mrf.mxu0
      %v646 = vadd.f32 %v453, %v645
      %v647 = vpop.f32.mrf.mxu0
      %648 = vmatprep.mubr.bf16.mxu0 %v489
      %649 = vmatmul.mubr.bf16.gmra.mxu0 %v488
      %v650 = vpop.f32.mrf.mxu0
      %v651 = vadd.f32 %v458, %v650
      %v652 = vpop.f32.mrf.mxu0
      %v653 = vpop.f32.mrf.mxu0
      %v654 = vadd.f32 %v463, %v653
      %v655 = vpop.f32.mrf.mxu0
      %656 = vdwg.mxu0
      %657 = vmatprep.subr.bf16.mxu0 0
      %658 = vmatpush1.bf16.msra.mxu0 0
      %659 = vmatprep.subr.bf16.mxu0 0
      %660 = vmatpush1.bf16.msra.mxu0 0
      %661 = vmatprep.subr.bf16.mxu0 0
      %662 = vmatpush1.bf16.msra.mxu0 0
      %663 = vmatprep.subr.bf16.mxu0 0
      %664 = vmatpush1.bf16.msra.mxu0 0
      %665 = vmatprep.subr.bf16.mxu0 0
      %666 = vmatpush1.bf16.msra.mxu0 0
      %667 = vmatprep.subr.bf16.mxu0 0
      %668 = vmatpush1.bf16.msra.mxu0 0
      %669 = vmatprep.subr.bf16.mxu0 0
      %670 = vmatpush1.bf16.msra.mxu0 %v421
      %671 = vmatprep.subr.bf16.mxu0 0
      %672 = vmatpush1.bf16.msra.mxu0 %v415
      %673 = vmatprep.subr.bf16.mxu0 0
      %674 = vmatpush2.bf16.msra.mxu0 0
      %675 = vmatprep.subr.bf16.mxu0 0
      %676 = vmatpush2.bf16.msra.mxu0 0
      %677 = vmatprep.subr.bf16.mxu0 0
      %678 = vmatpush2.bf16.msra.mxu0 0
      %679 = vmatprep.subr.bf16.mxu0 0
      %680 = vmatpush2.bf16.msra.mxu0 0
      %681 = vmatprep.subr.bf16.mxu0 0
      %682 = vmatpush2.bf16.msra.mxu0 0
      %683 = vmatprep.subr.bf16.mxu0 0
      %684 = vmatpush2.bf16.msra.mxu0 0
      %685 = vmatprep.subr.bf16.mxu0 0
      %686 = vmatpush2.bf16.msra.mxu0 0
      %687 = vmatprep.subr.bf16.mxu0 0
      %688 = vmatpush2.bf16.msra.mxu0 0
      %689 = vmatprep.mubr.bf16.mxu0 0
      %690 = vmatmul.mubr.bf16.gmra.mxu0 %v497
      %v691 = vpop.f32.mrf.mxu0
      %v692 = vadd.f32 %v643, %v691
      %v693 = vpop.f32.mrf.mxu0
      %v694 = vpop.f32.mrf.mxu0
      %v695 = vadd.f32 %v646, %v694
      %v696 = vpop.f32.mrf.mxu0
      %697 = vmatprep.mubr.bf16.mxu0 0
      %698 = vmatmul.mubr.bf16.gmra.mxu0 %v500
      %v699 = vpop.f32.mrf.mxu0
      %v700 = vadd.f32 %v651, %v699
      %v701 = vpop.f32.mrf.mxu0
      %v702 = vpop.f32.mrf.mxu0
      %v703 = vadd.f32 %v654, %v702
      %v704 = vpop.f32.mrf.mxu0
      %705 = vdwg.mxu0
      %v706 = vmax.f32 %v590, 0.0
      %v707 = vmax.f32 %v592, 0.0
      %v708 = vmax.f32 %v692, 0.0
      %v709 = vmax.f32 %v594, 0.0
      %v710 = vmax.f32 %v596, 0.0
      %v711 = vmax.f32 %v695, 0.0
      %v712 = vmax.f32 %v600, 0.0
      %v713 = vmax.f32 %v602, 0.0
      %v714 = vmax.f32 %v700, 0.0
      %v715 = vmax.f32 %v604, 0.0
      %v716 = vmax.f32 %v606, 0.0
      %v717 = vmax.f32 %v703, 0.0
      %718 = vst [vmem:[%s206] sm:$0xff] %v706
      %719 = vst [vmem:[%s206 + $0x8] sm:$0xff] %v707
      %720 = vst.msk [vmem:[%s206 + $0x10] sm:$0xff] %vm495, %v708
      %721 = vst [vmem:[%s206 + $0x18] sm:$0xff] %v709
      %722 = vst [vmem:[%s206 + $0x20] sm:$0xff] %v710
      %723 = vst.msk [vmem:[%s206 + $0x28] sm:$0xff] %vm495, %v711
      %724 = vst [vmem:[%s206 + $0x30] sm:$0xff] %v712
      %725 = vst [vmem:[%s206 + $0x38] sm:$0xff] %v713
      %726 = vst.msk [vmem:[%s206 + $0x40] sm:$0xff] %vm495, %v714
      %727 = vst [vmem:[%s206 + $0x48] sm:$0xff] %v715
      %728 = vst [vmem:[%s206 + $0x50] sm:$0xff] %v716
      %729 = vst.msk [vmem:[%s206 + $0x58] sm:$0xff] %vm495, %v717
      %s730 = smul.u32 3, %s19
      %p731 = scmp.lt.s32.totalorder %s18, 1
      %s732 = scalar_select %p731, %s18, 1
      %p733 = scmp.lt.s32.totalorder %s730, 2
      %s734 = scalar_select %p733, %s730, 2
      %s735 = smul.addr %s732, 12
      %s736 = sadd.s32 %s734, %s735
      %s737 = smul.addr %s736, 8
      %s738 = scalar_lea.vmem %s3, %s737
      // Predicated region
      $region33: #{_conv2d_s1_pallas.1} parent=31 // pred_check
        %p739 = pneg %p116
      $region34: #{_conv2d_s1_pallas.1} parent=31 // pred_check_branch
        %741 = sbr.rel (%p739) target = $region36
      $region35: #{_conv2d_s1_pallas.1} parent=31 // pred_region
        %s742 = smul.u32 3, %s19
      $region36: #{_conv2d_s1_pallas.1} parent=31 // pred_fallthru
        _
    $region32: #{_conv2d_s1_pallas.1} parent=5 // pred_fallthru
      _
    %p743 = scmp.le.s32.totalorder 2, %s9
    // Predicated region
    $region37: #{_conv2d_s1_pallas.1} parent=5 // pred_check
      %p744 = pneg %p743
    $region38: #{_conv2d_s1_pallas.1} parent=5 // pred_check_branch
      %746 = sbr.rel (%p744) target = $region40
    $region39: #{_conv2d_s1_pallas.1} parent=5 // pred_region
      %s747 = ssub.s32 %s9, 2
      // Predicated region
      $region41: #{_conv2d_s1_pallas.1} parent=39 // pred_check
        %p748 = pneg %p122
      $region42: #{_conv2d_s1_pallas.1} parent=39 // pred_check_branch
        %750 = sbr.rel (%p748) target = $region44
      $region43: #{_conv2d_s1_pallas.1} parent=39 // pred_region
        %s751 = smul.u32 3, %s21
        %p752 = scmp.lt.s32.totalorder %s20, 1
        %s753 = scalar_select %p752, %s20, 1
        %p754 = scmp.lt.s32.totalorder %s751, 2
        %s755 = scalar_select %p754, %s751, 2
        %s756 = smul.addr %s753, 12
        %s757 = sadd.s32 %s755, %s756
        %s758 = smul.addr %s757, 8
        %s759 = scalar_lea.vmem %s3, %s758
      $region44: #{_conv2d_s1_pallas.1} parent=39 // pred_fallthru
        _
    $region40: #{_conv2d_s1_pallas.1} parent=5 // pred_fallthru
      _
  $region6: #{_conv2d_s1_pallas.1} parent=0 // loop_footer
    %s13 = sadd.s32 1, %s9
  $region7: #{_conv2d_s1_pallas.1} parent=0 // loop_footer_branch
    %8 = sbr.rel target = $region3
  $region8: #{_conv2d_s1_pallas.1} parent=0 // loop_exit
    _

</llo_original>
